<compile_context>
chip_gen: v7x
topology: tpu7x:2x2x1
jax: 0.10.0
libtpu: 0.0.40
codegen_flags: <defaults>
</compile_context>

<pallas_src>
import jax
import jax.numpy as jnp
import numpy as np
from jax.experimental import pallas as pl
from jax.experimental.pallas import tpu as pltpu


def _largest_divisor_leq(n: int, cap: int) -> int:
    for c in range(min(n, cap), 0, -1):
        if n % c == 0:
            return c
    return 1


def _pick_batch_tile(B: int, V: int) -> int:
    # Keep roughly <=128 MXU rows of work per grid step and <=16 unrolled
    # per-row matmuls; large V needs no batch tiling (M = V already fills MXU).
    cap = max(1, min(16, 128 // max(V, 1)))
    return _largest_divisor_leq(B, cap)


def kvw_linear_kernel(ebig_ref, bproj_ref, x_ref, w_ref, o_ref):
    # ebig_ref : (V, D*O) f32, ebig[v, d*O + o] = embedding[v, d]  (resident)
    # bproj_ref: (V, O)   f32, embedding @ bias                    (resident)
    # x_ref    : (bt, V, I)    x[b0:b0+bt, k]                      (K squeezed)
    # w_ref    : (D*O, I)      weight[k] flattened over (D, O)     (K squeezed)
    # o_ref    : (bt, V, O)    out[b0:b0+bt, k]                    (K squeezed)
    bt = x_ref.shape[0]
    o_sz = o_ref.shape[-1]
    do_sz = ebig_ref.shape[-1]
    d_sz = do_sz // o_sz

    ebig = ebig_ref[...]        # (V, D*O), f32
    bproj = bproj_ref[...]      # (V, O),   f32
    w_flat = w_ref[...]         # (D*O, I)

    for b in range(bt):         # static, short (bounded by _pick_batch_tile)
        # MXU: t[v, d*O + o] = sum_i x[b, v, i] * W[k, d, o, i]
        t = jax.lax.dot_general(
            x_ref[b], w_flat,
            dimension_numbers=(((1,), (1,)), ((), ())),
            preferred_element_type=jnp.float32)            # (V, D*O), f32
        # VPU epilogue: fold embedding over D; bias projection is the init.
        prod = t * ebig                                    # single elementwise pass
        acc = bproj
        for d in range(d_sz):                              # static, = embed_size
            acc = acc + prod[:, d * o_sz:(d + 1) * o_sz]
        o_ref[b] = acc.astype(o_ref.dtype)


def kvw_linear(x, embedding, weight, bias=None):
    """Pallas implementation of kvwLinear.forward (embedding is a (V, D) table)."""
    B, K, V, I = x.shape
    Ve, D = embedding.shape
    Kw, Dw, O, Iw = weight.shape
    assert (K, V, I, D) == (Kw, Ve, Iw, Dw)
    if bias is not None:
        assert bias.shape == (D, O)

    # Bias projection (V, O): tiny one-off matmul, done once outside the kernel.
    if bias is None:
        b_proj = jnp.zeros((V, O), dtype=jnp.float32)
    else:
        b_proj = jnp.dot(embedding.astype(jnp.float32), bias.astype(jnp.float32),
                         preferred_element_type=jnp.float32)

    # Expanded embedding for the VPU epilogue: ebig[v, d*O + o] = embedding[v, d].
    e_big = jnp.repeat(embedding.astype(jnp.float32), O, axis=1)      # (V, D*O)

    # Contiguous (free) reshape: (K, D, O, I) -> (K, D*O, I). No relayout.
    w_flat = weight.reshape(K, D * O, I)

    bt = _pick_batch_tile(B, V)
    grid = (K, B // bt)   # batch innermost -> weight tile stays resident per k

    flops = 2 * B * K * V * I * D * O + 2 * B * K * V * D * O
    bytes_accessed = (x.size * x.dtype.itemsize
                      + B * K * V * O * x.dtype.itemsize
                      + w_flat.size * w_flat.dtype.itemsize
                      + e_big.size * 4 + b_proj.size * 4)

    out = pl.pallas_call(
        kvw_linear_kernel,
        out_shape=jax.ShapeDtypeStruct((B, K, V, O), x.dtype),
        grid=grid,
        in_specs=[
            pl.BlockSpec((V, D * O), lambda k, b: (0, 0)),               # ebig (resident)
            pl.BlockSpec((V, O), lambda k, b: (0, 0)),                   # embedding @ bias
            pl.BlockSpec((bt, None, V, I), lambda k, b: (b, k, 0, 0)),   # x  (K squeezed)
            pl.BlockSpec((None, D * O, I), lambda k, b: (k, 0, 0)),      # weight[k]
        ],
        out_specs=pl.BlockSpec((bt, None, V, O), lambda k, b: (b, k, 0, 0)),
        compiler_params=pltpu.CompilerParams(
            dimension_semantics=("parallel", "parallel"),
            vmem_limit_bytes=64 * 1024 * 1024,
        ),
        cost_estimate=pl.CostEstimate(flops=flops, transcendentals=0,
                                      bytes_accessed=bytes_accessed),
    )(e_big, b_proj, x, w_flat)

    return out


if __name__ == "__main__":
    key = jax.random.PRNGKey(0)
    B, K, V = 2, 2, 4
    in_size, out_size, embed_size = 32, 16, 8

    kx, ke, kw, kb = jax.random.split(key, 4)
    x = jax.random.normal(kx, (B, K, V, in_size), dtype=jnp.float32)
    embedding = jax.random.normal(ke, (V, embed_size), dtype=jnp.float32)

    # Deterministic parameter init (shapes from kvwLinear.__init__; bounds mimic
    # kaiming_uniform_(a=sqrt(5)) / the bias fan_in rule).
    fan_in = embed_size * out_size * in_size
    bound = 1.0 / float(np.sqrt(fan_in))
    weight = jax.random.uniform(kw, (K, embed_size, out_size, in_size),
                                minval=-bound, maxval=bound, dtype=jnp.float32)
    bias = jax.random.uniform(kb, (embed_size, out_size),
                              minval=-bound, maxval=bound, dtype=jnp.float32)

    out = jax.jit(kvw_linear)(x, embedding, weight, bias)
    out = jax.block_until_ready(out)

    # Pure-JAX reference mirroring the PyTorch einsums.
    w_full = jnp.einsum('vd,kdoi->kvoi', embedding, weight)
    b_full = jnp.einsum('vd,do->vo', embedding, bias)
    ref = jnp.einsum('bkvi,kvoi->bkvo', x, w_full) + b_full

    assert out.shape == (B, K, V, out_size)
    np.testing.assert_allclose(np.asarray(out), np.asarray(ref), rtol=1e-5, atol=1e-5)
    print("KERNEL_OK")
</pallas_src>

<mosaic_0001>
module attributes {stable_mosaic.version = 11 : i64} {
  func.func @kvw_linear_kernel(%arg0: i32, %arg1: i32, %arg2: memref<4x128xf32, #tpu.memory_space<vmem>>, %arg3: memref<4x16xf32, #tpu.memory_space<vmem>>, %arg4: memref<2x1x4x32xf32, #tpu.memory_space<vmem>>, %arg5: memref<1x128x32xf32, #tpu.memory_space<vmem>>, %arg6: memref<2x1x4x16xf32, #tpu.memory_space<vmem>>) attributes {dimension_semantics = [#tpu.dimension_semantics<parallel>, #tpu.dimension_semantics<parallel>], iteration_bounds = array<i64: 2, 1>, scalar_prefetch = 0 : i64, scratch_operands = 0 : i64, tpu.core_type = #tpu.core_type<tc>, window_params = [{pipeline_mode = #tpu.pipeline_mode<synchronous>, transform_indices = @transform_0, window_bounds = array<i64: 4, 128>}, {pipeline_mode = #tpu.pipeline_mode<synchronous>, transform_indices = @transform_1, window_bounds = array<i64: 4, 16>}, {transform_indices = @transform_2, window_bounds = array<i64: 2, 1, 4, 32>}, {transform_indices = @transform_3, window_bounds = array<i64: 1, 128, 32>}, {transform_indices = @transform_4, window_bounds = array<i64: 2, 1, 4, 16>}]} {
    %c0 = arith.constant 0 : index
    %c0_0 = arith.constant 0 : index
    %0 = vector.load %arg2[%c0, %c0_0] : memref<4x128xf32, #tpu.memory_space<vmem>>, vector<4x128xf32>
    %c0_1 = arith.constant 0 : index
    %c0_2 = arith.constant 0 : index
    %1 = vector.load %arg3[%c0_1, %c0_2] : memref<4x16xf32, #tpu.memory_space<vmem>>, vector<4x16xf32>
    %c0_3 = arith.constant 0 : index
    %c0_4 = arith.constant 0 : index
    %c0_5 = arith.constant 0 : index
    %2 = vector.load %arg5[%c0_3, %c0_4, %c0_5] : memref<1x128x32xf32, #tpu.memory_space<vmem>>, vector<1x128x32xf32>
    %3 = vector.shape_cast %2 : vector<1x128x32xf32> to vector<128x32xf32>
    %c0_6 = arith.constant 0 : index
    %c0_7 = arith.constant 0 : index
    %c0_8 = arith.constant 0 : index
    %c0_9 = arith.constant 0 : index
    %4 = vector.load %arg4[%c0_6, %c0_7, %c0_8, %c0_9] : memref<2x1x4x32xf32, #tpu.memory_space<vmem>>, vector<1x1x4x32xf32>
    %5 = vector.shape_cast %4 : vector<1x1x4x32xf32> to vector<4x32xf32>
    %cst = arith.constant dense<0.000000e+00> : vector<4x128xf32>
    %6 = tpu.matmul %5, %3, %cst {dimension_numbers = #tpu.dot_dimension_numbers<[1], [1], [0], [0], [0, 0, 1, 0], [], []>} : vector<4x32xf32>, vector<128x32xf32>, vector<4x128xf32> -> vector<4x128xf32>
    %7 = arith.mulf %6, %0 : vector<4x128xf32>
    %8 = vector.extract_strided_slice %7 {offsets = [0, 0], sizes = [4, 16], strides = [1, 1]} : vector<4x128xf32> to vector<4x16xf32>
    %9 = arith.addf %1, %8 : vector<4x16xf32>
    %10 = vector.extract_strided_slice %7 {offsets = [0, 16], sizes = [4, 16], strides = [1, 1]} : vector<4x128xf32> to vector<4x16xf32>
    %11 = arith.addf %9, %10 : vector<4x16xf32>
    %12 = vector.extract_strided_slice %7 {offsets = [0, 32], sizes = [4, 16], strides = [1, 1]} : vector<4x128xf32> to vector<4x16xf32>
    %13 = arith.addf %11, %12 : vector<4x16xf32>
    %14 = vector.extract_strided_slice %7 {offsets = [0, 48], sizes = [4, 16], strides = [1, 1]} : vector<4x128xf32> to vector<4x16xf32>
    %15 = arith.addf %13, %14 : vector<4x16xf32>
    %16 = vector.extract_strided_slice %7 {offsets = [0, 64], sizes = [4, 16], strides = [1, 1]} : vector<4x128xf32> to vector<4x16xf32>
    %17 = arith.addf %15, %16 : vector<4x16xf32>
    %18 = vector.extract_strided_slice %7 {offsets = [0, 80], sizes = [4, 16], strides = [1, 1]} : vector<4x128xf32> to vector<4x16xf32>
    %19 = arith.addf %17, %18 : vector<4x16xf32>
    %20 = vector.extract_strided_slice %7 {offsets = [0, 96], sizes = [4, 16], strides = [1, 1]} : vector<4x128xf32> to vector<4x16xf32>
    %21 = arith.addf %19, %20 : vector<4x16xf32>
    %22 = vector.extract_strided_slice %7 {offsets = [0, 112], sizes = [4, 16], strides = [1, 1]} : vector<4x128xf32> to vector<4x16xf32>
    %23 = arith.addf %21, %22 : vector<4x16xf32>
    %c0_10 = arith.constant 0 : index
    %c0_11 = arith.constant 0 : index
    %c0_12 = arith.constant 0 : index
    %c0_13 = arith.constant 0 : index
    %24 = vector.load %arg6[%c0_10, %c0_11, %c0_12, %c0_13] : memref<2x1x4x16xf32, #tpu.memory_space<vmem>>, vector<1x1x4x16xf32>
    %25 = vector.shape_cast %24 : vector<1x1x4x16xf32> to vector<4x16xf32>
    %26 = vector.shape_cast %23 : vector<4x16xf32> to vector<1x1x4x16xf32>
    tpu.vector_store %arg6[%c0_10, %c0_11, %c0_12, %c0_13], %26 {strides = array<i32>} : memref<2x1x4x16xf32, #tpu.memory_space<vmem>>, vector<1x1x4x16xf32>,
    %c1 = arith.constant 1 : index
    %c0_14 = arith.constant 0 : index
    %c0_15 = arith.constant 0 : index
    %c0_16 = arith.constant 0 : index
    %27 = vector.load %arg4[%c1, %c0_14, %c0_15, %c0_16] : memref<2x1x4x32xf32, #tpu.memory_space<vmem>>, vector<1x1x4x32xf32>
    %28 = vector.shape_cast %27 : vector<1x1x4x32xf32> to vector<4x32xf32>
    %cst_17 = arith.constant dense<0.000000e+00> : vector<4x128xf32>
    %29 = tpu.matmul %28, %3, %cst_17 {dimension_numbers = #tpu.dot_dimension_numbers<[1], [1], [0], [0], [0, 0, 1, 0], [], []>} : vector<4x32xf32>, vector<128x32xf32>, vector<4x128xf32> -> vector<4x128xf32>
    %30 = arith.mulf %29, %0 : vector<4x128xf32>
    %31 = vector.extract_strided_slice %30 {offsets = [0, 0], sizes = [4, 16], strides = [1, 1]} : vector<4x128xf32> to vector<4x16xf32>
    %32 = arith.addf %1, %31 : vector<4x16xf32>
    %33 = vector.extract_strided_slice %30 {offsets = [0, 16], sizes = [4, 16], strides = [1, 1]} : vector<4x128xf32> to vector<4x16xf32>
    %34 = arith.addf %32, %33 : vector<4x16xf32>
    %35 = vector.extract_strided_slice %30 {offsets = [0, 32], sizes = [4, 16], strides = [1, 1]} : vector<4x128xf32> to vector<4x16xf32>
    %36 = arith.addf %34, %35 : vector<4x16xf32>
    %37 = vector.extract_strided_slice %30 {offsets = [0, 48], sizes = [4, 16], strides = [1, 1]} : vector<4x128xf32> to vector<4x16xf32>
    %38 = arith.addf %36, %37 : vector<4x16xf32>
    %39 = vector.extract_strided_slice %30 {offsets = [0, 64], sizes = [4, 16], strides = [1, 1]} : vector<4x128xf32> to vector<4x16xf32>
    %40 = arith.addf %38, %39 : vector<4x16xf32>
    %41 = vector.extract_strided_slice %30 {offsets = [0, 80], sizes = [4, 16], strides = [1, 1]} : vector<4x128xf32> to vector<4x16xf32>
    %42 = arith.addf %40, %41 : vector<4x16xf32>
    %43 = vector.extract_strided_slice %30 {offsets = [0, 96], sizes = [4, 16], strides = [1, 1]} : vector<4x128xf32> to vector<4x16xf32>
    %44 = arith.addf %42, %43 : vector<4x16xf32>
    %45 = vector.extract_strided_slice %30 {offsets = [0, 112], sizes = [4, 16], strides = [1, 1]} : vector<4x128xf32> to vector<4x16xf32>
    %46 = arith.addf %44, %45 : vector<4x16xf32>
    %c1_18 = arith.constant 1 : index
    %c0_19 = arith.constant 0 : index
    %c0_20 = arith.constant 0 : index
    %c0_21 = arith.constant 0 : index
    %47 = vector.load %arg6[%c1_18, %c0_19, %c0_20, %c0_21] : memref<2x1x4x16xf32, #tpu.memory_space<vmem>>, vector<1x1x4x16xf32>
    %48 = vector.shape_cast %47 : vector<1x1x4x16xf32> to vector<4x16xf32>
    %49 = vector.shape_cast %46 : vector<4x16xf32> to vector<1x1x4x16xf32>
    tpu.vector_store %arg6[%c1_18, %c0_19, %c0_20, %c0_21], %49 {strides = array<i32>} : memref<2x1x4x16xf32, #tpu.memory_space<vmem>>, vector<1x1x4x16xf32>,
    return
  }
  func.func @transform_0(%arg0: i32, %arg1: i32) -> (i32, i32) {
    %c0_i32 = arith.constant 0 : i32
    %c0_i32_0 = arith.constant 0 : i32
    %c0_i32_1 = arith.constant 0 : i32
    return %c0_i32, %c0_i32_0 : i32, i32
  }
  func.func @transform_1(%arg0: i32, %arg1: i32) -> (i32, i32) {
    %c0_i32 = arith.constant 0 : i32
    %c0_i32_0 = arith.constant 0 : i32
    %c0_i32_1 = arith.constant 0 : i32
    return %c0_i32, %c0_i32_0 : i32, i32
  }
  func.func @transform_2(%arg0: i32, %arg1: i32) -> (i32, i32, i32, i32) {
    %c0_i32 = arith.constant 0 : i32
    %c0_i32_0 = arith.constant 0 : i32
    %c0_i32_1 = arith.constant 0 : i32
    return %arg1, %arg0, %c0_i32, %c0_i32_0 : i32, i32, i32, i32
  }
  func.func @transform_3(%arg0: i32, %arg1: i32) -> (i32, i32, i32) {
    %c0_i32 = arith.constant 0 : i32
    %c0_i32_0 = arith.constant 0 : i32
    %c0_i32_1 = arith.constant 0 : i32
    return %arg0, %c0_i32, %c0_i32_0 : i32, i32, i32
  }
  func.func @transform_4(%arg0: i32, %arg1: i32) -> (i32, i32, i32, i32) {
    %c0_i32 = arith.constant 0 : i32
    %c0_i32_0 = arith.constant 0 : i32
    %c0_i32_1 = arith.constant 0 : i32
    return %arg1, %arg0, %c0_i32, %c0_i32_0 : i32, i32, i32, i32
  }
}

</mosaic_0001>

<llo_original>
// kernel: kvw_linear.1
$region0: #{kvw_linear.1}
  #allocation0 [shape = 'u32[]', space=smem, size = 0x4, offset = 0x4, fixed_abs, tag = 'smem constant byte address 0x4 - core index']
  #allocation1 [shape = 'u32[144,128]{1,0:T(1,128)}', space=vmem, size = 0x12000, scoped, tag = 'internal scratch']
  %s0 = inlined_call_operand.hbm [shape: f32[4,128], index: 0, kind: input, shape index: {}]
  %s1 = inlined_call_operand.hbm [shape: f32[4,16], index: 1, kind: input, shape index: {}]
  %s2 = inlined_call_operand.hbm [shape: f32[2,2,4,32], index: 2, kind: input, shape index: {}]
  %s3 = inlined_call_operand.hbm [shape: f32[2,128,32], index: 3, kind: input, shape index: {}]
  %s4 = inlined_call_operand.hbm [shape: f32[2,2,4,16], index: 4, kind: output, shape index: {}]
  %s5 = sld [smem:[#allocation0]]
  $region65: #{kvw_linear.1} parent=0
    _
  %s7 = ssub.s32 1, %s5
  %s8 = scalar_select 0, %s7, %s5
  $region1: #{kvw_linear.1} parent=0
    #allocation2 [shape = 'u8[2048]{0}', space=vmem, size = 0x800, scoped, tag = 'input window, operand 0, single buffered']
    #allocation3 [shape = 's32[2]{0}', space=sflag, size = 0x8, scoped, tag = 'scoped memory for kvw_linear.1']
    #allocation4 [shape = 's32[2]{0}', space=sflag, size = 0x8, scoped, tag = 'scoped memory for kvw_linear.1']
    #allocation5 [shape = 'u8[2048]{0}', space=vmem, size = 0x800, scoped, tag = 'input window, operand 1, single buffered']
    #allocation6 [shape = 's32[1]{0}', space=sflag, size = 0x4, scoped, tag = 'scoped memory for kvw_linear.1']
    #allocation7 [shape = 'u8[8192]{0}', space=vmem, size = 0x2000, scoped, tag = 'input window, operand 2']
    #allocation8 [shape = 'u8[131072]{0}', space=vmem, size = 0x20000, scoped, tag = 'input window, operand 3']
    #allocation9 [shape = 'u8[8192]{0}', space=vmem, size = 0x2000, scoped, tag = 'output window, operand 0']
    %9 = vsyncpa [#allocation3], 0
    %10 = vsyncpa [#allocation6], 0
    %11 = vsyncpa [#allocation4], 0
    %s12 = scalar_lea.sflag [#allocation4], 1
    %13 = vsyncpa %s12, 0
    loop: start=0, step=1, limit=4
    $region2: #{kvw_linear.1} parent=1 // loop_pre_header
      _
    $region3: #{kvw_linear.1} parent=1 // loop_header
      %s15 = sphi 0, %s19
      %p16 = scmp.ge.s32.totalorder %s15, 4
      %s22 = sphi 0, %s34
      %s23 = sphi 0, %s30
      %s24 = sphi 0, %s22
      %s25 = sphi 0, %s23
      %s26 = sphi 0, %s24
      %s27 = sphi 0, %s25
      %s35 = sphi 0, %s35
      %s37 = sphi 0, %s35
      %s38 = sphi 0, %s37
      %s52 = sphi 0, %s38
      %s56 = sphi 0, %s56
      %s58 = sphi 0, %s56
      %s59 = sphi 0, %s58
      %s73 = sphi 0, %s59
      %s81 = sphi 0, %s83
      %s84 = sphi 0, %s81
      %s85 = sphi 0, %s84
      %s101 = sphi 0, %s85
      %s107 = sphi 0, %s109
      %s110 = sphi 0, %s107
      %s111 = sphi 0, %s110
      %s127 = sphi 0, %s111
      %s135 = sphi 0, %s137
      %s138 = sphi 0, %s135
      %s139 = sphi 0, %s138
      %s155 = sphi 0, %s139
    $region4: #{kvw_linear.1} parent=1 // loop_header_branch
      %18 = sbr.rel (%p16) target = $region8
    $region5: #{kvw_linear.1} parent=1 // loop_body
      %s20 = ssub.s32 %s15, 1
      %s21 = ssub.s32 %s15, 2
      %s28 = sadd.s32 1, %s23
      %p29 = scmp.ge.s32.totalorder %s28, 1
      %s30 = scalar_select %p29, 0, %s28
      %s31 = sadd.s32 1, %s22
      %s32 = scalar_select %p29, %s31, %s22
      %p33 = scmp.ge.s32.totalorder %s32, 2
      %s34 = scalar_select %p33, 0, %s32
      %s36 = sadd.s32 %s35, 1
      %p39 = scmp.eq.s32.totalorder %s15, 1
      %p40 = scmp.ne.s32.totalorder %s35, %s37
      %p41 = scmp.eq.s32.totalorder %s15, 0
      %p42 = por %p40, %p41
      %p43 = scmp.ne.s32.totalorder %s35, %s37
      %p44 = scmp.eq.s32.totalorder %s20, 1
      %p45 = por %p43, %p44
      %p46 = scmp.ne.s32.totalorder %s37, %s38
      %p47 = scmp.eq.s32.totalorder %s20, 0
      %p48 = por %p46, %p47
      %p49 = scmp.ne.s32.totalorder %s37, %s38
      %p50 = scmp.eq.s32.totalorder %s21, 1
      %p51 = por %p49, %p50
      %p53 = scmp.ne.s32.totalorder %s38, %s52
      %p54 = scmp.eq.s32.totalorder %s21, 0
      %p55 = por %p53, %p54
      %s57 = sadd.s32 %s56, 1
      %p60 = scmp.eq.s32.totalorder %s15, 1
      %p61 = scmp.ne.s32.totalorder %s56, %s58
      %p62 = scmp.eq.s32.totalorder %s15, 0
      %p63 = por %p61, %p62
      %p64 = scmp.ne.s32.totalorder %s56, %s58
      %p65 = scmp.eq.s32.totalorder %s20, 1
      %p66 = por %p64, %p65
      %p67 = scmp.ne.s32.totalorder %s58, %s59
      %p68 = scmp.eq.s32.totalorder %s20, 0
      %p69 = por %p67, %p68
      %p70 = scmp.ne.s32.totalorder %s58, %s59
      %p71 = scmp.eq.s32.totalorder %s21, 1
      %p72 = por %p70, %p71
      %p74 = scmp.ne.s32.totalorder %s59, %s73
      %p75 = scmp.eq.s32.totalorder %s21, 0
      %p76 = por %p74, %p75
      %s77 = ssub.s32 %s23, %s30
      %s78 = ssub.s32 %s22, %s34
      %s79 = sor.u32 %s77, %s78
      %p80 = scmp.eq.s32.totalorder %s79, 0
      %s82 = sadd.s32 %s81, 1
      %s83 = scalar_select %p80, %s81, %s82
      %p86 = pneg %p80
      %p87 = scmp.eq.s32.totalorder %s15, 1
      %p88 = por %p86, %p87
      %p89 = scmp.ne.s32.totalorder %s81, %s84
      %p90 = scmp.eq.s32.totalorder %s15, 0
      %p91 = por %p89, %p90
      %p92 = scmp.ne.s32.totalorder %s81, %s84
      %p93 = scmp.eq.s32.totalorder %s20, 1
      %p94 = por %p92, %p93
      %p95 = scmp.ne.s32.totalorder %s84, %s85
      %p96 = scmp.eq.s32.totalorder %s20, 0
      %p97 = por %p95, %p96
      %p98 = scmp.ne.s32.totalorder %s84, %s85
      %p99 = scmp.eq.s32.totalorder %s21, 1
      %p100 = por %p98, %p99
      %p102 = scmp.ne.s32.totalorder %s85, %s101
      %p103 = scmp.eq.s32.totalorder %s21, 0
      %p104 = por %p102, %p103
      %s105 = ssub.s32 %s22, %s34
      %p106 = scmp.eq.s32.totalorder %s105, 0
      %s108 = sadd.s32 %s107, 1
      %s109 = scalar_select %p106, %s107, %s108
      %p112 = pneg %p106
      %p113 = scmp.eq.s32.totalorder %s15, 1
      %p114 = por %p112, %p113
      %p115 = scmp.ne.s32.totalorder %s107, %s110
      %p116 = scmp.eq.s32.totalorder %s15, 0
      %p117 = por %p115, %p116
      %p118 = scmp.ne.s32.totalorder %s107, %s110
      %p119 = scmp.eq.s32.totalorder %s20, 1
      %p120 = por %p118, %p119
      %p121 = scmp.ne.s32.totalorder %s110, %s111
      %p122 = scmp.eq.s32.totalorder %s20, 0
      %p123 = por %p121, %p122
      %p124 = scmp.ne.s32.totalorder %s110, %s111
      %p125 = scmp.eq.s32.totalorder %s21, 1
      %p126 = por %p124, %p125
      %p128 = scmp.ne.s32.totalorder %s111, %s127
      %p129 = scmp.eq.s32.totalorder %s21, 0
      %p130 = por %p128, %p129
      %s131 = ssub.s32 %s23, %s30
      %s132 = ssub.s32 %s22, %s34
      %s133 = sor.u32 %s131, %s132
      %p134 = scmp.eq.s32.totalorder %s133, 0
      %s136 = sadd.s32 %s135, 1
      %s137 = scalar_select %p134, %s135, %s136
      %p140 = pneg %p134
      %p141 = scmp.eq.s32.totalorder %s15, 1
      %p142 = por %p140, %p141
      %p143 = scmp.ne.s32.totalorder %s135, %s138
      %p144 = scmp.eq.s32.totalorder %s15, 0
      %p145 = por %p143, %p144
      %p146 = scmp.ne.s32.totalorder %s135, %s138
      %p147 = scmp.eq.s32.totalorder %s20, 1
      %p148 = por %p146, %p147
      %p149 = scmp.ne.s32.totalorder %s138, %s139
      %p150 = scmp.eq.s32.totalorder %s20, 0
      %p151 = por %p149, %p150
      %p152 = scmp.ne.s32.totalorder %s138, %s139
      %p153 = scmp.eq.s32.totalorder %s21, 1
      %p154 = por %p152, %p153
      %p156 = scmp.ne.s32.totalorder %s139, %s155
      %p157 = scmp.eq.s32.totalorder %s21, 0
      %p158 = por %p156, %p157
      %p159 = scmp.le.s32.totalorder 1, %s15
      %p160 = scmp.lt.s32.totalorder %s15, 3
      %p161 = pnand %p159, %p160
      %p162 = pneg %p161
      // Predicated region
      $region9: #{kvw_linear.1} parent=5 // pred_check
        _
      $region10: #{kvw_linear.1} parent=5 // pred_check_branch
        %164 = sbr.rel (%p161) target = $region12
      $region11: #{kvw_linear.1} parent=5 // pred_region
        %s165 = ssub.s32 %s15, 1
        // Predicated region
        $region13: #{kvw_linear.1} parent=11 // pred_check
          %p166 = pneg %p48
        $region14: #{kvw_linear.1} parent=11 // pred_check_branch
          %168 = sbr.rel (%p166) target = $region16
        $region15: #{kvw_linear.1} parent=11 // pred_region
          %s170 = ssub.s32 64, 64
          %171 = vsyncadd [#allocation3], %s170
          %s173 = sshll.u32 [#allocation2], 4
          %s174 = int_to_ptr.vmem [resolvable:$true] %s173
          %176 = dma.hbm_to_vmem [thread:$0]  %s0, 64, %s174, [#allocation3]
        $region16: #{kvw_linear.1} parent=11 // pred_fallthru
          _
        // Predicated region
        $region17: #{kvw_linear.1} parent=11 // pred_check
          %p177 = pneg %p69
        $region18: #{kvw_linear.1} parent=11 // pred_check_branch
          %179 = sbr.rel (%p177) target = $region20
        $region19: #{kvw_linear.1} parent=11 // pred_region
          %s181 = ssub.s32 64, 64
          %182 = vsyncadd [#allocation6], %s181
          %s184 = sshll.u32 [#allocation5], 4
          %s185 = int_to_ptr.vmem [resolvable:$true] %s184
          %187 = dma.hbm_to_vmem [thread:$0]  %s1, 64, %s185, [#allocation6]
        $region20: #{kvw_linear.1} parent=11 // pred_fallthru
          _
      $region12: #{kvw_linear.1} parent=5 // pred_fallthru
        _
      %p188 = scmp.lt.s32.totalorder %s15, 2
      // Predicated region
      $region21: #{kvw_linear.1} parent=5 // pred_check
        %p189 = pneg %p188
      $region22: #{kvw_linear.1} parent=5 // pred_check_branch
        %191 = sbr.rel (%p189) target = $region24
      $region23: #{kvw_linear.1} parent=5 // pred_region
        // Predicated region
        $region25: #{kvw_linear.1} parent=23 // pred_check
          %p192 = pneg %p91
        $region26: #{kvw_linear.1} parent=23 // pred_check_branch
          %194 = sbr.rel (%p192) target = $region28
        $region27: #{kvw_linear.1} parent=23 // pred_region
          %s195 = sand.u32 %s15, 1
          %s196 = scalar_lea.sflag [#allocation3], %s195
          %s197 = sand.u32 %s81, 1
          %s198 = smul.addr %s197, 8
          %s199 = scalar_lea.vmem [#allocation7], %s198
          %s200 = smul.u32 2, %s23
          %s202 = ssub.s32 128, 128
          %203 = vsyncadd %s196, %s202
          %s204 = smul.addr %s200, 2
          %s205 = sadd.s32 %s22, %s204
          %s206 = smul.addr %s205, 64
          %s207 = scalar_lea.hbm %s2, %s206
          %s208 = sshll.u32 %s199, 4
          %s209 = int_to_ptr.vmem [resolvable:$true] %s208
          %214 = dma.hbm_to_vmem [thread:$0]  %s207, 128, %s209, %s196, 128, 64, 4
        $region28: #{kvw_linear.1} parent=23 // pred_fallthru
          _
        // Predicated region
        $region29: #{kvw_linear.1} parent=23 // pred_check
          %p215 = pneg %p117
        $region30: #{kvw_linear.1} parent=23 // pred_check_branch
          %217 = sbr.rel (%p215) target = $region32
        $region31: #{kvw_linear.1} parent=23 // pred_region
          %s218 = sand.u32 %s15, 1
          %s219 = scalar_lea.sflag [#allocation3], %s218
          %s220 = sand.u32 %s107, 1
          %s221 = smul.addr %s220, 128
          %s222 = scalar_lea.vmem [#allocation8], %s221
          %s224 = ssub.s32 2048, 2048
          %225 = vsyncadd %s219, %s224
          %s226 = smul.addr %s22, 16
          %s227 = smul.addr %s226, 128
          %s228 = scalar_lea.hbm %s3, %s227
          %s229 = sshll.u32 %s222, 4
          %s230 = int_to_ptr.vmem [resolvable:$true] %s229
          %235 = dma.hbm_to_vmem [thread:$0]  %s228, 2048, %s230, %s219, 128, 128, 8
        $region32: #{kvw_linear.1} parent=23 // pred_fallthru
          _
      $region24: #{kvw_linear.1} parent=5 // pred_fallthru
        _
      %p236 = scmp.le.s32.totalorder 1, %s15
      %p237 = scmp.lt.s32.totalorder %s15, 3
      %p238 = pnand %p236, %p237
      %p239 = pneg %p238
      // Predicated region
      $region33: #{kvw_linear.1} parent=5 // pred_check
        _
      $region34: #{kvw_linear.1} parent=5 // pred_check_branch
        %241 = sbr.rel (%p238) target = $region36
      $region35: #{kvw_linear.1} parent=5 // pred_region
        %s242 = ssub.s32 %s15, 1
        // Predicated region
        $region37: #{kvw_linear.1} parent=35 // pred_check
          %p243 = pneg %p48
        $region38: #{kvw_linear.1} parent=35 // pred_check_branch
          %245 = sbr.rel (%p243) target = $region40
        $region39: #{kvw_linear.1} parent=35 // pred_region
          %246 = dma.done [#allocation3], 64
        $region40: #{kvw_linear.1} parent=35 // pred_fallthru
          _
        // Predicated region
        $region41: #{kvw_linear.1} parent=35 // pred_check
          %p247 = pneg %p69
        $region42: #{kvw_linear.1} parent=35 // pred_check_branch
          %249 = sbr.rel (%p247) target = $region44
        $region43: #{kvw_linear.1} parent=35 // pred_region
          %250 = dma.done [#allocation6], 64
        $region44: #{kvw_linear.1} parent=35 // pred_fallthru
          _
        %s251 = sand.u32 %s20, 1
        %s252 = scalar_lea.sflag [#allocation3], %s251
        %s253 = sand.u32 %s84, 1
        %s254 = smul.addr %s253, 8
        %s255 = scalar_lea.vmem [#allocation7], %s254
        // Predicated region
        $region45: #{kvw_linear.1} parent=35 // pred_check
          %p256 = pneg %p97
        $region46: #{kvw_linear.1} parent=35 // pred_check_branch
          %258 = sbr.rel (%p256) target = $region48
        $region47: #{kvw_linear.1} parent=35 // pred_region
          %259 = dma.done %s252, 128
        $region48: #{kvw_linear.1} parent=35 // pred_fallthru
          _
        %s260 = sand.u32 %s20, 1
        %s261 = scalar_lea.sflag [#allocation3], %s260
        %s262 = sand.u32 %s110, 1
        %s263 = smul.addr %s262, 128
        %s264 = scalar_lea.vmem [#allocation8], %s263
        // Predicated region
        $region49: #{kvw_linear.1} parent=35 // pred_check
          %p265 = pneg %p123
        $region50: #{kvw_linear.1} parent=35 // pred_check_branch
          %267 = sbr.rel (%p265) target = $region52
        $region51: #{kvw_linear.1} parent=35 // pred_region
          %268 = dma.done %s261, 2048
        $region52: #{kvw_linear.1} parent=35 // pred_fallthru
          _
        %p269 = pneg %p48
        %p270 = pneg %p45
        %p271 = pneg %p69
        %p272 = pneg %p66
        %s273 = sand.u32 %s20, 1
        %s274 = scalar_lea.sflag [#allocation3], %s273
        %s275 = sand.u32 %s84, 1
        %s276 = smul.addr %s275, 8
        %s277 = scalar_lea.vmem [#allocation7], %s276
        %p278 = pneg %p97
        %p279 = pneg %p94
        %s280 = sand.u32 %s20, 1
        %s281 = scalar_lea.sflag [#allocation3], %s280
        %s282 = sand.u32 %s110, 1
        %s283 = smul.addr %s282, 128
        %s284 = scalar_lea.vmem [#allocation8], %s283
        %p285 = pneg %p123
        %p286 = pneg %p120
        %p287 = pneg %p151
        %p288 = pneg %p148
        %s289 = sand.u32 %s138, 1
        %s290 = scalar_lea.sflag [#allocation4], %s289
        %s291 = sand.u32 %s138, 1
        %s292 = smul.addr %s291, 8
        %s293 = scalar_lea.vmem [#allocation9], %s292
        %s294 = smul.u32 2, %s25
        %s295 = smul.u32 2, %s25
        %v296 = vld [vmem:[#allocation2] sm:$0xf]
        %v297 = vld [vmem:[#allocation5] sm:$0xf]
        %v298 = vld [vmem:[%s264] sm:$0xff]
        %v299 = vld [vmem:[%s264 + $0x8] sm:$0xff]
        %v300 = vld [vmem:[%s264 + $0x10] sm:$0xff]
        %v301 = vld [vmem:[%s264 + $0x18] sm:$0xff]
        %v302 = vld [vmem:[%s264 + $0x20] sm:$0xff]
        %v303 = vld [vmem:[%s264 + $0x28] sm:$0xff]
        %v304 = vld [vmem:[%s264 + $0x30] sm:$0xff]
        %v305 = vld [vmem:[%s264 + $0x38] sm:$0xff]
        %v306 = vld [vmem:[%s264 + $0x40] sm:$0xff]
        %v307 = vld [vmem:[%s264 + $0x48] sm:$0xff]
        %v308 = vld [vmem:[%s264 + $0x50] sm:$0xff]
        %v309 = vld [vmem:[%s264 + $0x58] sm:$0xff]
        %v310 = vld [vmem:[%s264 + $0x60] sm:$0xff]
        %v311 = vld [vmem:[%s264 + $0x68] sm:$0xff]
        %v312 = vld [vmem:[%s264 + $0x70] sm:$0xff]
        %v313 = vld [vmem:[%s264 + $0x78] sm:$0xff]
        %v314 = vld [vmem:[%s255] sm:$0xf]
        %vm315 = vcmask 261120
        %v317 = vsel %vm315, %v314, 0
        %v320 = vsel %vm315, %v298, 0
        %v323 = vsel %vm315, %v299, 0
        %v326 = vsel %vm315, %v300, 0
        %v329 = vsel %vm315, %v301, 0
        %v332 = vsel %vm315, %v302, 0
        %v335 = vsel %vm315, %v303, 0
        %v338 = vsel %vm315, %v304, 0
        %v341 = vsel %vm315, %v305, 0
        %v344 = vsel %vm315, %v306, 0
        %v347 = vsel %vm315, %v307, 0
        %v350 = vsel %vm315, %v308, 0
        %v353 = vsel %vm315, %v309, 0
        %v356 = vsel %vm315, %v310, 0
        %v359 = vsel %vm315, %v311, 0
        %v362 = vsel %vm315, %v312, 0
        %v365 = vsel %vm315, %v313, 0
        %367 = vmatprep.subr.mxu0 0.0
        %368 = vmatpush1.xpose.msra.mxu0 %v320
        %369 = vmatprep.subr.mxu0 0.0
        %370 = vmatpush1.xpose.msra.mxu0 %v323
        %371 = vmatprep.subr.mxu0 0.0
        %372 = vmatpush1.xpose.msra.mxu0 %v326
        %373 = vmatprep.subr.mxu0 0.0
        %374 = vmatpush1.xpose.msra.mxu0 %v329
        %375 = vmatprep.subr.mxu0 0.0
        %376 = vmatpush1.xpose.msra.mxu0 %v332
        %377 = vmatprep.subr.mxu0 0.0
        %378 = vmatpush1.xpose.msra.mxu0 %v335
        %379 = vmatprep.subr.mxu0 0.0
        %380 = vmatpush1.xpose.msra.mxu0 %v338
        %381 = vmatprep.subr.mxu0 0.0
        %382 = vmatpush1.xpose.msra.mxu0 %v341
        %383 = vmatprep.subr.mxu0 0.0
        %384 = vmatpush1.xpose.msra.mxu0 %v344
        %385 = vmatprep.subr.mxu0 0.0
        %386 = vmatpush1.xpose.msra.mxu0 %v347
        %387 = vmatprep.subr.mxu0 0.0
        %388 = vmatpush1.xpose.msra.mxu0 %v350
        %389 = vmatprep.subr.mxu0 0.0
        %390 = vmatpush1.xpose.msra.mxu0 %v353
        %391 = vmatprep.subr.mxu0 0.0
        %392 = vmatpush1.xpose.msra.mxu0 %v356
        %393 = vmatprep.subr.mxu0 0.0
        %394 = vmatpush1.xpose.msra.mxu0 %v359
        %395 = vmatprep.subr.mxu0 0.0
        %396 = vmatpush1.xpose.msra.mxu0 %v362
        %397 = vmatprep.subr.mxu0 0.0
        %398 = vmatpush1.xpose.msra.mxu0 %v365
        %399 = vmatprep.subr.mxu0 0.0
        %400 = vmatpush1.xpose.msra.mxu0 0.0
        %401 = vmatprep.subr.mxu0 0.0
        %402 = vmatpush1.xpose.msra.mxu0 0.0
        %403 = vmatprep.subr.mxu0 0.0
        %404 = vmatpush1.xpose.msra.mxu0 0.0
        %405 = vmatprep.subr.mxu0 0.0
        %406 = vmatpush1.xpose.msra.mxu0 0.0
        %407 = vmatprep.subr.mxu0 0.0
        %408 = vmatpush1.xpose.msra.mxu0 0.0
        %409 = vmatprep.subr.mxu0 0.0
        %410 = vmatpush1.xpose.msra.mxu0 0.0
        %411 = vmatprep.subr.mxu0 0.0
        %412 = vmatpush1.xpose.msra.mxu0 0.0
        %413 = vmatprep.subr.mxu0 0.0
        %414 = vmatpush1.xpose.msra.mxu0 0.0
        %415 = vmatprep.subr.mxu0 0.0
        %416 = vmatpush1.xpose.msra.mxu0 0.0
        %417 = vmatprep.subr.mxu0 0.0
        %418 = vmatpush1.xpose.msra.mxu0 0.0
        %419 = vmatprep.subr.mxu0 0.0
        %420 = vmatpush1.xpose.msra.mxu0 0.0
        %421 = vmatprep.subr.mxu0 0.0
        %422 = vmatpush1.xpose.msra.mxu0 0.0
        %423 = vmatprep.subr.mxu0 0.0
        %424 = vmatpush1.xpose.msra.mxu0 0.0
        %425 = vmatprep.subr.mxu0 0.0
        %426 = vmatpush1.xpose.msra.mxu0 0.0
        %427 = vmatprep.subr.mxu0 0.0
        %428 = vmatpush1.xpose.msra.mxu0 0.0
        %429 = vmatprep.subr.mxu0 0.0
        %430 = vmatpush1.xpose.msra.mxu0 0.0
        %431 = vmatprep.mubr.f32.mxu0 0.0
        %432 = vmatmul.mubr.f32.gmra.mrb[0].mxu0 %v317
        %v433 = vpop.f32.mrb[0].mxu0
        %v434 = vadd.f32 0.0, %v433
        %v435 = vpop.f32.mrb[0].mxu0
        %436 = vdwg.mxu0
        %v437 = vmul.f32 %v434, %v296
        %v438 = vadd.f32 %v297, %v437
        %440 = vrot.lane.b32.xlu0 %v437, 112
        %v441 = vpop.permute.xlu0 %440
        %v443 = vadd.f32 %v438, %v441
        %444 = vrot.lane.b32.xlu0 %v437, 96
        %v445 = vpop.permute.xlu0 %444
        %v447 = vadd.f32 %v443, %v445
        %448 = vrot.lane.b32.xlu0 %v437, 80
        %v449 = vpop.permute.xlu0 %448
        %v451 = vadd.f32 %v447, %v449
        %452 = vrot.lane.b32.xlu0 %v437, 64
        %v453 = vpop.permute.xlu0 %452
        %v455 = vadd.f32 %v451, %v453
        %456 = vrot.lane.b32.xlu0 %v437, 48
        %v457 = vpop.permute.xlu0 %456
        %v459 = vadd.f32 %v455, %v457
        %460 = vrot.lane.b32.xlu0 %v437, 32
        %v461 = vpop.permute.xlu0 %460
        %v463 = vadd.f32 %v459, %v461
        %464 = vrot.lane.b32.xlu0 %v437, 16
        %v465 = vpop.permute.xlu0 %464
        %v467 = vadd.f32 %v463, %v465
        %vm468 = vcmask 125952
        %469 = vst.msk [vmem:[%s293] sm:$0xf] %vm468, %v467
        %s470 = scalar_lea.vmem %s255, 4 [#allocation7]
        %v471 = vld [vmem:[%s470] sm:$0xf]
        %v473 = vsel %vm315, %v471, 0
        %475 = vmatprep.subr.mxu0 0.0
        %476 = vmatpush1.xpose.msra.mxu0 %v320
        %477 = vmatprep.subr.mxu0 0.0
        %478 = vmatpush1.xpose.msra.mxu0 %v323
        %479 = vmatprep.subr.mxu0 0.0
        %480 = vmatpush1.xpose.msra.mxu0 %v326
        %481 = vmatprep.subr.mxu0 0.0
        %482 = vmatpush1.xpose.msra.mxu0 %v329
        %483 = vmatprep.subr.mxu0 0.0
        %484 = vmatpush1.xpose.msra.mxu0 %v332
        %485 = vmatprep.subr.mxu0 0.0
        %486 = vmatpush1.xpose.msra.mxu0 %v335
        %487 = vmatprep.subr.mxu0 0.0
        %488 = vmatpush1.xpose.msra.mxu0 %v338
        %489 = vmatprep.subr.mxu0 0.0
        %490 = vmatpush1.xpose.msra.mxu0 %v341
        %491 = vmatprep.subr.mxu0 0.0
        %492 = vmatpush1.xpose.msra.mxu0 %v344
        %493 = vmatprep.subr.mxu0 0.0
        %494 = vmatpush1.xpose.msra.mxu0 %v347
        %495 = vmatprep.subr.mxu0 0.0
        %496 = vmatpush1.xpose.msra.mxu0 %v350
        %497 = vmatprep.subr.mxu0 0.0
        %498 = vmatpush1.xpose.msra.mxu0 %v353
        %499 = vmatprep.subr.mxu0 0.0
        %500 = vmatpush1.xpose.msra.mxu0 %v356
        %501 = vmatprep.subr.mxu0 0.0
        %502 = vmatpush1.xpose.msra.mxu0 %v359
        %503 = vmatprep.subr.mxu0 0.0
        %504 = vmatpush1.xpose.msra.mxu0 %v362
        %505 = vmatprep.subr.mxu0 0.0
        %506 = vmatpush1.xpose.msra.mxu0 %v365
        %507 = vmatprep.subr.mxu0 0.0
        %508 = vmatpush1.xpose.msra.mxu0 0.0
        %509 = vmatprep.subr.mxu0 0.0
        %510 = vmatpush1.xpose.msra.mxu0 0.0
        %511 = vmatprep.subr.mxu0 0.0
        %512 = vmatpush1.xpose.msra.mxu0 0.0
        %513 = vmatprep.subr.mxu0 0.0
        %514 = vmatpush1.xpose.msra.mxu0 0.0
        %515 = vmatprep.subr.mxu0 0.0
        %516 = vmatpush1.xpose.msra.mxu0 0.0
        %517 = vmatprep.subr.mxu0 0.0
        %518 = vmatpush1.xpose.msra.mxu0 0.0
        %519 = vmatprep.subr.mxu0 0.0
        %520 = vmatpush1.xpose.msra.mxu0 0.0
        %521 = vmatprep.subr.mxu0 0.0
        %522 = vmatpush1.xpose.msra.mxu0 0.0
        %523 = vmatprep.subr.mxu0 0.0
        %524 = vmatpush1.xpose.msra.mxu0 0.0
        %525 = vmatprep.subr.mxu0 0.0
        %526 = vmatpush1.xpose.msra.mxu0 0.0
        %527 = vmatprep.subr.mxu0 0.0
        %528 = vmatpush1.xpose.msra.mxu0 0.0
        %529 = vmatprep.subr.mxu0 0.0
        %530 = vmatpush1.xpose.msra.mxu0 0.0
        %531 = vmatprep.subr.mxu0 0.0
        %532 = vmatpush1.xpose.msra.mxu0 0.0
        %533 = vmatprep.subr.mxu0 0.0
        %534 = vmatpush1.xpose.msra.mxu0 0.0
        %535 = vmatprep.subr.mxu0 0.0
        %536 = vmatpush1.xpose.msra.mxu0 0.0
        %537 = vmatprep.subr.mxu0 0.0
        %538 = vmatpush1.xpose.msra.mxu0 0.0
        %539 = vmatprep.mubr.f32.mxu0 0.0
        %540 = vmatmul.mubr.f32.gmra.mrb[0].mxu0 %v473
        %v541 = vpop.f32.mrb[0].mxu0
        %v542 = vadd.f32 0.0, %v541
        %v543 = vpop.f32.mrb[0].mxu0
        %544 = vdwg.mxu0
        %v545 = vmul.f32 %v542, %v296
        %v546 = vadd.f32 %v297, %v545
        %548 = vrot.lane.b32.xlu0 %v545, 112
        %v549 = vpop.permute.xlu0 %548
        %v551 = vadd.f32 %v546, %v549
        %552 = vrot.lane.b32.xlu0 %v545, 96
        %v553 = vpop.permute.xlu0 %552
        %v555 = vadd.f32 %v551, %v553
        %556 = vrot.lane.b32.xlu0 %v545, 80
        %v557 = vpop.permute.xlu0 %556
        %v559 = vadd.f32 %v555, %v557
        %560 = vrot.lane.b32.xlu0 %v545, 64
        %v561 = vpop.permute.xlu0 %560
        %v563 = vadd.f32 %v559, %v561
        %564 = vrot.lane.b32.xlu0 %v545, 48
        %v565 = vpop.permute.xlu0 %564
        %v567 = vadd.f32 %v563, %v565
        %568 = vrot.lane.b32.xlu0 %v545, 32
        %v569 = vpop.permute.xlu0 %568
        %v571 = vadd.f32 %v567, %v569
        %572 = vrot.lane.b32.xlu0 %v545, 16
        %v573 = vpop.permute.xlu0 %572
        %v575 = vadd.f32 %v571, %v573
        %s576 = scalar_lea.vmem %s293, 4 [#allocation9]
        %577 = vst.msk [vmem:[%s576] sm:$0xf] %vm468, %v575
        %s578 = sand.u32 %s138, 1
        %s579 = scalar_lea.sflag [#allocation4], %s578
        %s580 = sand.u32 %s138, 1
        %s581 = smul.addr %s580, 8
        %s582 = scalar_lea.vmem [#allocation9], %s581
        // Predicated region
        $region53: #{kvw_linear.1} parent=35 // pred_check
          %p583 = pneg %p148
        $region54: #{kvw_linear.1} parent=35 // pred_check_branch
          %585 = sbr.rel (%p583) target = $region56
        $region55: #{kvw_linear.1} parent=35 // pred_region
          %s586 = smul.u32 2, %s25
          %s588 = ssub.s32 128, 128
          %589 = vsyncadd %s579, %s588
          %s590 = smul.addr %s586, 2
          %s591 = sadd.s32 %s24, %s590
          %s592 = smul.addr %s591, 64
          %s593 = scalar_lea.hbm %s4, %s592
          %s594 = sshll.u32 %s582, 4
          %s595 = int_to_ptr.vmem [resolvable:$true] %s594
          %600 = dma.vmem_to_hbm [thread:$0]  %s595, 128, %s593, %s579, 64, 128, 4
        $region56: #{kvw_linear.1} parent=35 // pred_fallthru
          _
      $region36: #{kvw_linear.1} parent=5 // pred_fallthru
        _
      %p601 = scmp.le.s32.totalorder 2, %s15
      // Predicated region
      $region57: #{kvw_linear.1} parent=5 // pred_check
        %p602 = pneg %p601
      $region58: #{kvw_linear.1} parent=5 // pred_check_branch
        %604 = sbr.rel (%p602) target = $region60
      $region59: #{kvw_linear.1} parent=5 // pred_region
        %s605 = ssub.s32 %s15, 2
        // Predicated region
        $region61: #{kvw_linear.1} parent=59 // pred_check
          %p606 = pneg %p154
        $region62: #{kvw_linear.1} parent=59 // pred_check_branch
          %608 = sbr.rel (%p606) target = $region64
        $region63: #{kvw_linear.1} parent=59 // pred_region
          %s609 = sand.u32 %s139, 1
          %s610 = scalar_lea.sflag [#allocation4], %s609
          %s611 = sand.u32 %s139, 1
          %s612 = smul.addr %s611, 8
          %s613 = scalar_lea.vmem [#allocation9], %s612
          %614 = dma.done %s610, 128
        $region64: #{kvw_linear.1} parent=59 // pred_fallthru
          _
      $region60: #{kvw_linear.1} parent=5 // pred_fallthru
        _
    $region6: #{kvw_linear.1} parent=1 // loop_footer
      %s19 = sadd.s32 1, %s15
    $region7: #{kvw_linear.1} parent=1 // loop_footer_branch
      %14 = sbr.rel target = $region3
    $region8: #{kvw_linear.1} parent=1 // loop_exit
      _
    %615 = vsyncpa [#allocation3], 1
    %s616 = scalar_lea.sflag [#allocation3], 1
    %617 = vsyncpa %s616, 1
    %618 = vsyncpa [#allocation6], 1
    %619 = vsyncpa [#allocation4], 1
    %s620 = scalar_lea.sflag [#allocation4], 1
    %621 = vsyncpa %s620, 1

</llo_original>
